<compile_context>
chip_gen: v7x
topology: tpu7x:2x2x1
jax: 0.10.0
libtpu: 0.0.40
codegen_flags: <defaults>
</compile_context>

<pallas_src>
import functools

import jax
import jax.numpy as jnp
from jax.experimental import pallas as pl
from jax.experimental.pallas import tpu as pltpu


def _round_up(x, m):
    return -(-x // m) * m


def _jaccard_sums_kernel(x_ref, t_ref, o_ref, acc_ref, *,
                         hw, chunk, n_chunks, needs_mask, reg_acc):
    # x_ref:   (C, TILE_HW)   logits tile (any float dtype), classes on sublanes
    # t_ref:   (1, TILE_HW)   int32 target tile
    # o_ref:   (1, 3, C)      per-batch partial sums (written once, last tile)
    # acc_ref: (3, C, CHUNK)  f32 per-lane accumulators across HW tiles:
    #   row 0: sum prob*onehot (intersection), row 1: sum prob, row 2: sum onehot
    j = pl.program_id(1)
    nj = pl.num_programs(1)

    @pl.when(j == 0)
    def _init():
        acc_ref[...] = jnp.zeros_like(acc_ref)

    c = x_ref.shape[0]
    tile = n_chunks * chunk
    base = j * tile

    # Hoisted constant (broadcast/iota is not CSE'd across unrolled iterations).
    classes = jax.lax.broadcasted_iota(jnp.int32, (c, chunk), 0)

    def chunk_sums(off, mask):
        x = x_ref[:, pl.ds(off, chunk)].astype(jnp.float32)      # (C, CHUNK)
        t = t_ref[:, pl.ds(off, chunk)]                          # (1, CHUNK)
        if mask is not None:
            # Must zero BEFORE exp: out-of-bounds lanes of a partial last block
            # hold unspecified (possibly inf/nan) data.
            x = jnp.where(mask, x, 0.0)
        # softmax over classes (== PyTorch softmax(dim=1) on NCHW)
        m = jnp.max(x, axis=0, keepdims=True)                    # (1, CHUNK)
        e = jnp.exp(x - m)                                       # (C, CHUNK)
        s = jnp.sum(e, axis=0, keepdims=True)                    # (1, CHUNK)
        inv = pl.reciprocal(s, approx=False)                     # exact: 1e-5 tol
        if mask is not None:
            inv = jnp.where(mask, inv, 0.0)
        prob = e * inv                                           # (C, CHUNK)
        oh = t == classes                                        # (C, CHUNK) bool
        if mask is not None:
            oh = jnp.logical_and(oh, mask)
        inter = jnp.where(oh, prob, 0.0)                         # select, no mul
        one_hot = oh.astype(jnp.float32)
        return inter, prob, one_hot

    def run_loop(masked):
        lane = None
        if masked:
            lane = jax.lax.broadcasted_iota(jnp.int32, (1, chunk), 1)
        unroll = True if n_chunks <= 4 else 4

        if reg_acc:
            # Register accumulators: pure VPU adds, no per-chunk VMEM RMW.
            def body(k, carry):
                a0, a1, a2 = carry
                off = pl.multiple_of(k * chunk, chunk)
                mask = (base + off + lane) < hw if masked else None
                i, p, o = chunk_sums(off, mask)
                return a0 + i, a1 + p, a2 + o

            zeros = jnp.zeros((c, chunk), jnp.float32)
            a0, a1, a2 = jax.lax.fori_loop(
                0, n_chunks, body, (zeros, zeros, zeros), unroll=unroll)
            # Fold into VMEM once per grid step (tile), not once per chunk.
            acc_ref[0] += a0
            acc_ref[1] += a1
            acc_ref[2] += a2
        else:
            # Large C: register accumulators would spill -> VMEM RMW per chunk.
            def body(k, carry):
                off = pl.multiple_of(k * chunk, chunk)
                mask = (base + off + lane) < hw if masked else None
                i, p, o = chunk_sums(off, mask)
                acc_ref[0] += i
                acc_ref[1] += p
                acc_ref[2] += o
                return carry

            jax.lax.fori_loop(0, n_chunks, body, 0, unroll=unroll)

    if needs_mask:
        # Mask math only on the ragged last tile; steady-state stays clean.
        @pl.when(j < nj - 1)
        def _steady():
            run_loop(False)

        @pl.when(j == nj - 1)
        def _edge():
            run_loop(True)
    else:
        run_loop(False)

    @pl.when(j == nj - 1)
    def _finalize():
        # Single cross-lane (XLU) reduction + tiny store per batch image.
        o_ref[0] = jnp.sum(acc_ref[...], axis=-1)                # (3, C)


def jaccard_loss(logits, target, smooth=1.0, max_tile=65536):
    """logits: (N, C, H, W) float, target: (N, H, W) int -> scalar loss."""
    N, C, H, W = logits.shape
    hw = H * W

    # Pixels-per-chunk on the lane axis: shrink when C (sublane rows) grows so
    # the unrolled inner body + register accumulators stay within vreg budget.
    chunk = 512 if C <= 8 else (256 if C <= 16 else 128)
    chunk = min(chunk, _round_up(hw, 128))

    x_bytes = jnp.dtype(logits.dtype).itemsize
    t_bytes = 4
    scratch_bytes = 3 * C * chunk * 4
    per_pixel = 2 * (C * x_bytes + t_bytes)       # double-buffered logits+target
    # Input-tile VMEM budget (double-buffered). vmem_limit_bytes is raised to
    # cover it, so it is safe on v5e (128 MiB physical) and stays well inside
    # v7x's 64 MiB part.
    budget = 16 * 1024 * 1024
    t_budget = max(chunk, (budget - scratch_bytes) // per_pixel)
    tile = min(max_tile, t_budget, _round_up(hw, chunk))
    tile = max(chunk, (tile // chunk) * chunk)
    n_chunks = tile // chunk
    n_hw_tiles = -(-hw // tile)                   # cdiv

    # Mask is only compiled if the last tile is ragged; it only *runs* there.
    needs_mask = (hw % tile) != 0
    # Register-accumulator footprint: 3 * C * chunk f32; fall back for huge C.
    reg_acc = (C * chunk) <= 8192

    x = logits.reshape(N, C, hw)                  # free reshape, no transpose
    t = target.reshape(N, 1, hw).astype(jnp.int32)

    kernel = functools.partial(
        _jaccard_sums_kernel, hw=hw, chunk=chunk, n_chunks=n_chunks,
        needs_mask=needs_mask, reg_acc=reg_acc)

    vmem_need = per_pixel * tile + scratch_bytes + (1 << 20)
    vmem_limit = int(min(48 * 1024 * 1024,
                         max(32 * 1024 * 1024, 2 * vmem_need)))

    cost = pl.CostEstimate(
        flops=15 * N * hw * C,
        transcendentals=N * hw * C,
        bytes_accessed=N * hw * (C * x_bytes + t_bytes) + N * 3 * C * 4)

    partials = pl.pallas_call(
        kernel,
        out_shape=jax.ShapeDtypeStruct((N, 3, C), jnp.float32),
        grid_spec=pltpu.PrefetchScalarGridSpec(
            num_scalar_prefetch=0,
            grid=(N, n_hw_tiles),
            in_specs=[
                pl.BlockSpec((None, C, tile), lambda b, j: (b, 0, j)),
                pl.BlockSpec((None, 1, tile), lambda b, j: (b, 0, j)),
            ],
            out_specs=pl.BlockSpec((1, 3, C), lambda b, j: (b, 0, 0)),
            scratch_shapes=[pltpu.VMEM((3, C, chunk), jnp.float32)],
        ),
        compiler_params=pltpu.CompilerParams(
            dimension_semantics=("parallel", "arbitrary"),
            vmem_limit_bytes=vmem_limit),
        cost_estimate=cost,
    )(x, t)

    sums = jnp.sum(partials, axis=0)              # (3, C)
    inter, psum, tsum = sums[0], sums[1], sums[2]
    dice = (inter + smooth) / (psum + tsum - inter + smooth)
    return 1.0 - jnp.mean(dice)


def _jaccard_loss_ref(logits, target, smooth=1.0):
    # pure-JAX reference mirroring the PyTorch forward
    N, C, H, W = logits.shape
    prob = jax.nn.softmax(logits, axis=1)
    prob = jnp.transpose(prob, (0, 2, 3, 1)).reshape(-1, C)
    t = target.reshape(-1)
    dice = []
    for c in range(C):
        tc = (t == c).astype(jnp.float32)
        pc = prob[:, c]
        inter = jnp.sum(pc * tc)
        dice.append((inter + smooth) / (jnp.sum(pc) + jnp.sum(tc) - inter + smooth))
    return 1.0 - jnp.mean(jnp.stack(dice))


if __name__ == "__main__":
    key = jax.random.PRNGKey(0)
    k1, k2 = jax.random.split(key)

    N, C, H, W = 2, 4, 16, 16
    logits = jax.random.normal(k1, (N, C, H, W), dtype=jnp.float32)
    target = jax.random.randint(k2, (N, H, W), 0, C, dtype=jnp.int32)

    loss = jax.block_until_ready(jaccard_loss(logits, target, smooth=1.0))
    ref = jax.block_until_ready(_jaccard_loss_ref(logits, target, smooth=1.0))
    assert jnp.allclose(loss, ref, atol=1e-5, rtol=1e-5), (loss, ref)

    print("KERNEL_OK")
</pallas_src>

<mosaic_0001>
module attributes {stable_mosaic.version = 11 : i64} {
  func.func @_jaccard_sums_kernel(%arg0: i32, %arg1: i32, %arg2: memref<1x4x256xf32, #tpu.memory_space<vmem>>, %arg3: memref<1x1x256xi32, #tpu.memory_space<vmem>>, %arg4: memref<1x3x4xf32, #tpu.memory_space<vmem>>, %arg5: memref<3x4x256xf32, #tpu.memory_space<vmem>>) attributes {dimension_semantics = [#tpu.dimension_semantics<parallel>, #tpu.dimension_semantics<arbitrary>], iteration_bounds = array<i64: 2, 1>, scalar_prefetch = 0 : i64, scratch_operands = 1 : i64, tpu.core_type = #tpu.core_type<tc>, window_params = [{transform_indices = @transform_0, window_bounds = array<i64: 1, 4, 256>}, {transform_indices = @transform_1, window_bounds = array<i64: 1, 1, 256>}, {transform_indices = @transform_2, window_bounds = array<i64: 1, 3, 4>}]} {
    %c0_i32 = arith.constant 0 : i32
    %0 = arith.cmpi eq, %arg1, %c0_i32 : i32
    %1 = arith.extui %0 : i1 to i32
    %c0_i32_0 = arith.constant 0 : i32
    %2 = arith.cmpi ne, %1, %c0_i32_0 : i32
    scf.if %2 {
      %cst_26 = arith.constant 0.000000e+00 : f32
      %53 = vector.broadcast %cst_26 : f32 to vector<3x4x256xf32>
      %c0_27 = arith.constant 0 : index
      %c0_28 = arith.constant 0 : index
      %c0_29 = arith.constant 0 : index
      %54 = vector.load %arg5[%c0_27, %c0_28, %c0_29] : memref<3x4x256xf32, #tpu.memory_space<vmem>>, vector<3x4x256xf32>
      tpu.vector_store %arg5[%c0_27, %c0_28, %c0_29], %53 {strides = array<i32>} : memref<3x4x256xf32, #tpu.memory_space<vmem>>, vector<3x4x256xf32>,
    } else {
    }
    %3 = tpu.iota {dimensions = array<i32: 0>} : vector<4x256xi32>
    %cst = arith.constant 0.000000e+00 : f32
    %4 = vector.broadcast %cst : f32 to vector<4x256xf32>
    %c0_i32_1 = arith.constant 0 : i32
    %c256_i32 = arith.constant 256 : i32
    %5 = arith.muli %c0_i32_1, %c256_i32 : i32
    %6 = tpu.assume_multiple %5, 256 : i32
    %c0 = arith.constant 0 : index
    %c0_2 = arith.constant 0 : index
    %7 = arith.index_cast %6 : i32 to index
    %8 = vector.load %arg2[%c0, %c0_2, %7] : memref<1x4x256xf32, #tpu.memory_space<vmem>>, vector<1x4x256xf32>
    %9 = vector.shape_cast %8 : vector<1x4x256xf32> to vector<4x256xf32>
    %c0_3 = arith.constant 0 : index
    %c0_4 = arith.constant 0 : index
    %10 = arith.index_cast %6 : i32 to index
    %11 = vector.load %arg3[%c0_3, %c0_4, %10] : memref<1x1x256xi32, #tpu.memory_space<vmem>>, vector<1x1x256xi32>
    %12 = vector.shape_cast %11 : vector<1x1x256xi32> to vector<1x256xi32>
    %cst_5 = arith.constant dense<0xFF800000> : vector<256xf32>
    %13 = vector.multi_reduction <maximumf>, %9, %cst_5 [0] : vector<4x256xf32> to vector<256xf32>
    %14 = vector.shape_cast %13 : vector<256xf32> to vector<1x256xf32>
    %15 = vector.broadcast %14 : vector<1x256xf32> to vector<4x256xf32>
    %16 = arith.subf %9, %15 : vector<4x256xf32>
    %17 = math.exp %16 : vector<4x256xf32>
    %cst_6 = arith.constant dense<0.000000e+00> : vector<256xf32>
    %18 = vector.multi_reduction <add>, %17, %cst_6 [0] : vector<4x256xf32> to vector<256xf32>
    %19 = vector.shape_cast %18 : vector<256xf32> to vector<1x256xf32>
    %20 = tpu.reciprocal %19 : vector<1x256xf32> -> vector<1x256xf32>
    %21 = vector.broadcast %20 : vector<1x256xf32> to vector<4x256xf32>
    %22 = arith.mulf %17, %21 : vector<4x256xf32>
    %23 = vector.broadcast %12 : vector<1x256xi32> to vector<4x256xi32>
    %24 = arith.cmpi eq, %23, %3 : vector<4x256xi32>
    %cst_7 = arith.constant 0.000000e+00 : f32
    %25 = vector.broadcast %cst_7 : f32 to vector<4x256xf32>
    %26 = arith.select %24, %22, %25 : vector<4x256xi1>, vector<4x256xf32>
    %27 = arith.extui %24 : vector<4x256xi1> to vector<4x256xi32>
    %28 = arith.sitofp %27 : vector<4x256xi32> to vector<4x256xf32>
    %29 = arith.addf %4, %26 : vector<4x256xf32>
    %30 = arith.addf %4, %22 : vector<4x256xf32>
    %31 = arith.addf %4, %28 : vector<4x256xf32>
    %c1_i32 = arith.constant 1 : i32
    %c0_8 = arith.constant 0 : index
    %c0_9 = arith.constant 0 : index
    %c0_10 = arith.constant 0 : index
    %32 = vector.load %arg5[%c0_8, %c0_9, %c0_10] : memref<3x4x256xf32, #tpu.memory_space<vmem>>, vector<1x4x256xf32>
    %33 = vector.shape_cast %32 : vector<1x4x256xf32> to vector<4x256xf32>
    %34 = arith.addf %33, %29 : vector<4x256xf32>
    %c0_11 = arith.constant 0 : index
    %c0_12 = arith.constant 0 : index
    %c0_13 = arith.constant 0 : index
    %35 = vector.load %arg5[%c0_11, %c0_12, %c0_13] : memref<3x4x256xf32, #tpu.memory_space<vmem>>, vector<1x4x256xf32>
    %36 = vector.shape_cast %35 : vector<1x4x256xf32> to vector<4x256xf32>
    %37 = vector.shape_cast %34 : vector<4x256xf32> to vector<1x4x256xf32>
    tpu.vector_store %arg5[%c0_11, %c0_12, %c0_13], %37 {strides = array<i32>} : memref<3x4x256xf32, #tpu.memory_space<vmem>>, vector<1x4x256xf32>,
    %c1 = arith.constant 1 : index
    %c0_14 = arith.constant 0 : index
    %c0_15 = arith.constant 0 : index
    %38 = vector.load %arg5[%c1, %c0_14, %c0_15] : memref<3x4x256xf32, #tpu.memory_space<vmem>>, vector<1x4x256xf32>
    %39 = vector.shape_cast %38 : vector<1x4x256xf32> to vector<4x256xf32>
    %40 = arith.addf %39, %30 : vector<4x256xf32>
    %c1_16 = arith.constant 1 : index
    %c0_17 = arith.constant 0 : index
    %c0_18 = arith.constant 0 : index
    %41 = vector.load %arg5[%c1_16, %c0_17, %c0_18] : memref<3x4x256xf32, #tpu.memory_space<vmem>>, vector<1x4x256xf32>
    %42 = vector.shape_cast %41 : vector<1x4x256xf32> to vector<4x256xf32>
    %43 = vector.shape_cast %40 : vector<4x256xf32> to vector<1x4x256xf32>
    tpu.vector_store %arg5[%c1_16, %c0_17, %c0_18], %43 {strides = array<i32>} : memref<3x4x256xf32, #tpu.memory_space<vmem>>, vector<1x4x256xf32>,
    %c2 = arith.constant 2 : index
    %c0_19 = arith.constant 0 : index
    %c0_20 = arith.constant 0 : index
    %44 = vector.load %arg5[%c2, %c0_19, %c0_20] : memref<3x4x256xf32, #tpu.memory_space<vmem>>, vector<1x4x256xf32>
    %45 = vector.shape_cast %44 : vector<1x4x256xf32> to vector<4x256xf32>
    %46 = arith.addf %45, %31 : vector<4x256xf32>
    %c2_21 = arith.constant 2 : index
    %c0_22 = arith.constant 0 : index
    %c0_23 = arith.constant 0 : index
    %47 = vector.load %arg5[%c2_21, %c0_22, %c0_23] : memref<3x4x256xf32, #tpu.memory_space<vmem>>, vector<1x4x256xf32>
    %48 = vector.shape_cast %47 : vector<1x4x256xf32> to vector<4x256xf32>
    %49 = vector.shape_cast %46 : vector<4x256xf32> to vector<1x4x256xf32>
    tpu.vector_store %arg5[%c2_21, %c0_22, %c0_23], %49 {strides = array<i32>} : memref<3x4x256xf32, #tpu.memory_space<vmem>>, vector<1x4x256xf32>,
    %c0_i32_24 = arith.constant 0 : i32
    %50 = arith.cmpi eq, %arg1, %c0_i32_24 : i32
    %51 = arith.extui %50 : i1 to i32
    %c0_i32_25 = arith.constant 0 : i32
    %52 = arith.cmpi ne, %51, %c0_i32_25 : i32
    scf.if %52 {
      %c0_26 = arith.constant 0 : index
      %c0_27 = arith.constant 0 : index
      %c0_28 = arith.constant 0 : index
      %53 = vector.load %arg5[%c0_26, %c0_27, %c0_28] : memref<3x4x256xf32, #tpu.memory_space<vmem>>, vector<3x4x256xf32>
      %cst_29 = arith.constant dense<0.000000e+00> : vector<3x4xf32>
      %54 = vector.multi_reduction <add>, %53, %cst_29 [2] : vector<3x4x256xf32> to vector<3x4xf32>
      %c0_30 = arith.constant 0 : index
      %c0_31 = arith.constant 0 : index
      %c0_32 = arith.constant 0 : index
      %55 = vector.load %arg4[%c0_30, %c0_31, %c0_32] : memref<1x3x4xf32, #tpu.memory_space<vmem>>, vector<1x3x4xf32>
      %56 = vector.shape_cast %55 : vector<1x3x4xf32> to vector<3x4xf32>
      %57 = vector.shape_cast %54 : vector<3x4xf32> to vector<1x3x4xf32>
      tpu.vector_store %arg4[%c0_30, %c0_31, %c0_32], %57 {strides = array<i32>} : memref<1x3x4xf32, #tpu.memory_space<vmem>>, vector<1x3x4xf32>,
    } else {
    }
    return
  }
  func.func @transform_0(%arg0: i32, %arg1: i32) -> (i32, i32, i32) {
    %c0_i32 = arith.constant 0 : i32
    %c0_i32_0 = arith.constant 0 : i32
    return %arg0, %c0_i32, %arg1 : i32, i32, i32
  }
  func.func @transform_1(%arg0: i32, %arg1: i32) -> (i32, i32, i32) {
    %c0_i32 = arith.constant 0 : i32
    %c0_i32_0 = arith.constant 0 : i32
    return %arg0, %c0_i32, %arg1 : i32, i32, i32
  }
  func.func @transform_2(%arg0: i32, %arg1: i32) -> (i32, i32, i32) {
    %c0_i32 = arith.constant 0 : i32
    %c0_i32_0 = arith.constant 0 : i32
    %c0_i32_1 = arith.constant 0 : i32
    return %arg0, %c0_i32, %c0_i32_0 : i32, i32, i32
  }
}

</mosaic_0001>

<llo_original>
// kernel: tpu_custom_call.1
$region0: #{tpu_custom_call.1}
  #allocation0 [shape = 'u32[]', space=smem, size = 0x4, offset = 0x4, fixed_abs, tag = 'smem constant byte address 0x4 - core index']
  #allocation1 [shape = 'u32[144,128]{1,0:T(1,128)}', space=vmem, size = 0x12000, scoped, tag = 'internal scratch']
  #allocation2 [shape = 'f32[3,4,256]{2,1,0:T(4,128)}', space=vmem, size = 0x3000, scoped, tag = 'scratch operand']
  %s0 = inlined_call_operand.hbm [shape: f32[2,4,256], index: 0, kind: input, shape index: {}]
  %s1 = inlined_call_operand.hbm [shape: s32[2,1,256], index: 1, kind: input, shape index: {}]
  %s2 = inlined_call_operand.vmem [shape: f32[2,3,4], index: 2, kind: output, shape index: {}]
  %s3 = sld [smem:[#allocation0]]
  $region57: #{tpu_custom_call.1} parent=0
    _
  %s5 = ssub.s32 1, %s3
  %s6 = scalar_select 0, %s5, %s3
  $region1: #{tpu_custom_call.1} parent=0
    #allocation3 [shape = 'u8[8192]{0}', space=vmem, size = 0x2000, scoped, tag = 'input window, operand 0']
    #allocation4 [shape = 's32[2]{0}', space=sflag, size = 0x8, scoped, tag = 'scoped memory for tpu_custom_call.1']
    #allocation5 [shape = 'u8[2048]{0}', space=vmem, size = 0x800, scoped, tag = 'input window, operand 1']
    #allocation6 [shape = 's32[2]{0}', space=sflag, size = 0x8, scoped, tag = 'scoped memory for tpu_custom_call.1']
    %7 = vsyncpa [#allocation4], 0
    %s8 = scalar_lea.sflag [#allocation4], 1
    %9 = vsyncpa %s8, 0
    %10 = vsyncpa [#allocation6], 0
    %s11 = scalar_lea.sflag [#allocation6], 1
    %12 = vsyncpa %s11, 0
    loop: start=0, step=1, limit=4
    $region2: #{tpu_custom_call.1} parent=1 // loop_pre_header
      _
    $region3: #{tpu_custom_call.1} parent=1 // loop_header
      %s14 = sphi 0, %s18
      %p15 = scmp.ge.s32.totalorder %s14, 4
      %s21 = sphi 0, %s33
      %s22 = sphi 0, %s29
      %s23 = sphi 0, %s21
      %s24 = sphi 0, %s22
      %s25 = sphi 0, %s23
      %s26 = sphi 0, %s24
      %s38 = sphi 0, %s40
      %s41 = sphi 0, %s38
      %s42 = sphi 0, %s41
      %s58 = sphi 0, %s42
      %s66 = sphi 0, %s68
      %s69 = sphi 0, %s66
      %s70 = sphi 0, %s69
      %s86 = sphi 0, %s70
      %s92 = sphi 0, %s94
      %s95 = sphi 0, %s92
      %s96 = sphi 0, %s95
      %s112 = sphi 0, %s96
    $region4: #{tpu_custom_call.1} parent=1 // loop_header_branch
      %17 = sbr.rel (%p15) target = $region8
    $region5: #{tpu_custom_call.1} parent=1 // loop_body
      %s19 = ssub.s32 %s14, 1
      %s20 = ssub.s32 %s14, 2
      %s27 = sadd.s32 1, %s22
      %p28 = scmp.ge.s32.totalorder %s27, 1
      %s29 = scalar_select %p28, 0, %s27
      %s30 = sadd.s32 1, %s21
      %s31 = scalar_select %p28, %s30, %s21
      %p32 = scmp.ge.s32.totalorder %s31, 2
      %s33 = scalar_select %p32, 0, %s31
      %s34 = ssub.s32 %s21, %s33
      %s35 = ssub.s32 %s22, %s29
      %s36 = sor.u32 %s34, %s35
      %p37 = scmp.eq.s32.totalorder %s36, 0
      %s39 = sadd.s32 %s38, 1
      %s40 = scalar_select %p37, %s38, %s39
      %p43 = pneg %p37
      %p44 = scmp.eq.s32.totalorder %s14, 1
      %p45 = por %p43, %p44
      %p46 = scmp.ne.s32.totalorder %s38, %s41
      %p47 = scmp.eq.s32.totalorder %s14, 0
      %p48 = por %p46, %p47
      %p49 = scmp.ne.s32.totalorder %s38, %s41
      %p50 = scmp.eq.s32.totalorder %s19, 1
      %p51 = por %p49, %p50
      %p52 = scmp.ne.s32.totalorder %s41, %s42
      %p53 = scmp.eq.s32.totalorder %s19, 0
      %p54 = por %p52, %p53
      %p55 = scmp.ne.s32.totalorder %s41, %s42
      %p56 = scmp.eq.s32.totalorder %s20, 1
      %p57 = por %p55, %p56
      %p59 = scmp.ne.s32.totalorder %s42, %s58
      %p60 = scmp.eq.s32.totalorder %s20, 0
      %p61 = por %p59, %p60
      %s62 = ssub.s32 %s21, %s33
      %s63 = ssub.s32 %s22, %s29
      %s64 = sor.u32 %s62, %s63
      %p65 = scmp.eq.s32.totalorder %s64, 0
      %s67 = sadd.s32 %s66, 1
      %s68 = scalar_select %p65, %s66, %s67
      %p71 = pneg %p65
      %p72 = scmp.eq.s32.totalorder %s14, 1
      %p73 = por %p71, %p72
      %p74 = scmp.ne.s32.totalorder %s66, %s69
      %p75 = scmp.eq.s32.totalorder %s14, 0
      %p76 = por %p74, %p75
      %p77 = scmp.ne.s32.totalorder %s66, %s69
      %p78 = scmp.eq.s32.totalorder %s19, 1
      %p79 = por %p77, %p78
      %p80 = scmp.ne.s32.totalorder %s69, %s70
      %p81 = scmp.eq.s32.totalorder %s19, 0
      %p82 = por %p80, %p81
      %p83 = scmp.ne.s32.totalorder %s69, %s70
      %p84 = scmp.eq.s32.totalorder %s20, 1
      %p85 = por %p83, %p84
      %p87 = scmp.ne.s32.totalorder %s70, %s86
      %p88 = scmp.eq.s32.totalorder %s20, 0
      %p89 = por %p87, %p88
      %s90 = ssub.s32 %s21, %s33
      %p91 = scmp.eq.s32.totalorder %s90, 0
      %s93 = sadd.s32 %s92, 1
      %s94 = scalar_select %p91, %s92, %s93
      %p97 = pneg %p91
      %p98 = scmp.eq.s32.totalorder %s14, 1
      %p99 = por %p97, %p98
      %p100 = scmp.ne.s32.totalorder %s92, %s95
      %p101 = scmp.eq.s32.totalorder %s14, 0
      %p102 = por %p100, %p101
      %p103 = scmp.ne.s32.totalorder %s92, %s95
      %p104 = scmp.eq.s32.totalorder %s19, 1
      %p105 = por %p103, %p104
      %p106 = scmp.ne.s32.totalorder %s95, %s96
      %p107 = scmp.eq.s32.totalorder %s19, 0
      %p108 = por %p106, %p107
      %p109 = scmp.ne.s32.totalorder %s95, %s96
      %p110 = scmp.eq.s32.totalorder %s20, 1
      %p111 = por %p109, %p110
      %p113 = scmp.ne.s32.totalorder %s96, %s112
      %p114 = scmp.eq.s32.totalorder %s20, 0
      %p115 = por %p113, %p114
      %p116 = scmp.le.s32.totalorder 1, %s14
      %p117 = scmp.lt.s32.totalorder %s14, 3
      %p118 = pnand %p116, %p117
      %p119 = pneg %p118
      // Predicated region
      $region9: #{tpu_custom_call.1} parent=5 // pred_check
        _
      $region10: #{tpu_custom_call.1} parent=5 // pred_check_branch
        %121 = sbr.rel (%p118) target = $region12
      $region11: #{tpu_custom_call.1} parent=5 // pred_region
        %s122 = ssub.s32 %s14, 1
      $region12: #{tpu_custom_call.1} parent=5 // pred_fallthru
        _
      %p123 = scmp.lt.s32.totalorder %s14, 2
      // Predicated region
      $region13: #{tpu_custom_call.1} parent=5 // pred_check
        %p124 = pneg %p123
      $region14: #{tpu_custom_call.1} parent=5 // pred_check_branch
        %126 = sbr.rel (%p124) target = $region16
      $region15: #{tpu_custom_call.1} parent=5 // pred_region
        // Predicated region
        $region17: #{tpu_custom_call.1} parent=15 // pred_check
          %p127 = pneg %p48
        $region18: #{tpu_custom_call.1} parent=15 // pred_check_branch
          %129 = sbr.rel (%p127) target = $region20
        $region19: #{tpu_custom_call.1} parent=15 // pred_region
          %s130 = sand.u32 %s38, 1
          %s131 = scalar_lea.sflag [#allocation4], %s130
          %s132 = sand.u32 %s38, 1
          %s133 = smul.addr %s132, 8
          %s134 = scalar_lea.vmem [#allocation3], %s133
          %s135 = smul.u32 2, %s22
          %s137 = ssub.s32 128, 128
          %138 = vsyncadd %s131, %s137
          %s139 = smul.addr %s21, 2
          %s140 = sadd.s32 %s135, %s139
          %s141 = smul.addr %s140, 64
          %s142 = scalar_lea.hbm %s0, %s141
          %s144 = sshll.u32 %s134, 4
          %s145 = int_to_ptr.vmem [resolvable:$true] %s144
          %147 = dma.hbm_to_vmem [thread:$0]  %s142, 128, %s145, %s131
        $region20: #{tpu_custom_call.1} parent=15 // pred_fallthru
          _
        // Predicated region
        $region21: #{tpu_custom_call.1} parent=15 // pred_check
          %p148 = pneg %p76
        $region22: #{tpu_custom_call.1} parent=15 // pred_check_branch
          %150 = sbr.rel (%p148) target = $region24
        $region23: #{tpu_custom_call.1} parent=15 // pred_region
          %s151 = sand.u32 %s66, 1
          %s152 = scalar_lea.sflag [#allocation6], %s151
          %s153 = sand.u32 %s66, 1
          %s154 = smul.addr %s153, 2
          %s155 = scalar_lea.vmem [#allocation5], %s154
          %s156 = smul.u32 2, %s22
          %s158 = ssub.s32 32, 32
          %159 = vsyncadd %s152, %s158
          %s160 = smul.addr %s21, 2
          %s161 = sadd.s32 %s156, %s160
          %s162 = smul.addr %s161, 16
          %s163 = scalar_lea.hbm %s1, %s162
          %s165 = sshll.u32 %s155, 4
          %s166 = int_to_ptr.vmem [resolvable:$true] %s165
          %168 = dma.hbm_to_vmem [thread:$0]  %s163, 32, %s166, %s152
        $region24: #{tpu_custom_call.1} parent=15 // pred_fallthru
          _
      $region16: #{tpu_custom_call.1} parent=5 // pred_fallthru
        _
      %p169 = scmp.le.s32.totalorder 1, %s14
      %p170 = scmp.lt.s32.totalorder %s14, 3
      %p171 = pnand %p169, %p170
      %p172 = pneg %p171
      // Predicated region
      $region25: #{tpu_custom_call.1} parent=5 // pred_check
        _
      $region26: #{tpu_custom_call.1} parent=5 // pred_check_branch
        %174 = sbr.rel (%p171) target = $region28
      $region27: #{tpu_custom_call.1} parent=5 // pred_region
        %s175 = ssub.s32 %s14, 1
        %s176 = sand.u32 %s41, 1
        %s177 = scalar_lea.sflag [#allocation4], %s176
        %s178 = sand.u32 %s41, 1
        %s179 = smul.addr %s178, 8
        %s180 = scalar_lea.vmem [#allocation3], %s179
        // Predicated region
        $region29: #{tpu_custom_call.1} parent=27 // pred_check
          %p181 = pneg %p54
        $region30: #{tpu_custom_call.1} parent=27 // pred_check_branch
          %183 = sbr.rel (%p181) target = $region32
        $region31: #{tpu_custom_call.1} parent=27 // pred_region
          %184 = dma.done %s177, 128
        $region32: #{tpu_custom_call.1} parent=27 // pred_fallthru
          _
        %s185 = sand.u32 %s69, 1
        %s186 = scalar_lea.sflag [#allocation6], %s185
        %s187 = sand.u32 %s69, 1
        %s188 = smul.addr %s187, 2
        %s189 = scalar_lea.vmem [#allocation5], %s188
        // Predicated region
        $region33: #{tpu_custom_call.1} parent=27 // pred_check
          %p190 = pneg %p82
        $region34: #{tpu_custom_call.1} parent=27 // pred_check_branch
          %192 = sbr.rel (%p190) target = $region36
        $region35: #{tpu_custom_call.1} parent=27 // pred_region
          %193 = dma.done %s186, 32
        $region36: #{tpu_custom_call.1} parent=27 // pred_fallthru
          _
        %s194 = sand.u32 %s41, 1
        %s195 = scalar_lea.sflag [#allocation4], %s194
        %s196 = sand.u32 %s41, 1
        %s197 = smul.addr %s196, 8
        %s198 = scalar_lea.vmem [#allocation3], %s197
        %p199 = pneg %p54
        %p200 = pneg %p51
        %s201 = sand.u32 %s69, 1
        %s202 = scalar_lea.sflag [#allocation6], %s201
        %s203 = sand.u32 %s69, 1
        %s204 = smul.addr %s203, 2
        %s205 = scalar_lea.vmem [#allocation5], %s204
        %p206 = pneg %p82
        %p207 = pneg %p79
        %p208 = pneg %p108
        %p209 = pneg %p105
        %p210 = scmp.lt.s32.totalorder %s23, 1
        %s211 = scalar_select %p210, %s23, 1
        %s212 = smul.addr %s211, 4
        %s213 = scalar_lea.vmem %s2, %s212
        %s214 = smul.u32 2, %s24
        %s215 = smul.u32 2, %s24
        %p216 = scmp.lt.s32.totalorder %s23, 1
        %s217 = scalar_select %p216, %s23, 1
        %s218 = smul.addr %s217, 4
        %s219 = scalar_lea.vmem %s2, %s218
        %p220 = scmp.eq.s32.totalorder %s24, 0
        // Predicated region
        $region37: #{tpu_custom_call.1} parent=27 // pred_check
          %p221 = pneg %p220
        $region38: #{tpu_custom_call.1} parent=27 // pred_check_branch
          %223 = sbr.rel (%p221) target = $region40
        $region39: #{tpu_custom_call.1} parent=27 // pred_region
          %224 = vst [vmem:[#allocation2] sm:$0xff] 0.0
          %225 = vst [vmem:[#allocation2 + $0x8] sm:$0xff] 0.0
          %226 = vst [vmem:[#allocation2 + $0x10] sm:$0xff] 0.0
        $region40: #{tpu_custom_call.1} parent=27 // pred_fallthru
          _
        %v227 = vlaneseq
        %v228 = vshrl.u32 %v227, 7
        %v229 = vld [vmem:[%s180] sm:$0xff]
        %v230 = vld [vmem:[%s189] sm:$0x3]
        %v232 = vcombine.high %v229, %v229
        %vm234 = vcmask 1043456
        %v235 = vsel %vm234, %v229, -inf
        %v236 = vrot.slane %v235, 4
        %v237 = vmax.f32 %v235, %v236
        %v238 = vrot.slane %v237, 2
        %v239 = vmax.f32 %v237, %v238
        %v240 = vrot.slane %v239, 1
        %v241 = vmax.f32 %v239, %v240
        %v242 = vsel %vm234, %v232, -inf
        %v243 = vrot.slane %v242, 4
        %v244 = vmax.f32 %v242, %v243
        %v245 = vrot.slane %v244, 2
        %v246 = vmax.f32 %v244, %v245
        %v247 = vrot.slane %v246, 1
        %v248 = vmax.f32 %v246, %v247
        %v251 = vcombine.low %v241, %v248
        %v253 = vsub.f32 %v229, %v251
        %v254 = vmul.f32 %v253, 1.442695
        %v255 = vpow.pop %v254
        %v257 = vcombine.high %v255, %v255
        %v259 = vsel %vm234, %v255, 0.0
        %v260 = vrot.slane %v259, 4
        %v261 = vadd.f32 %v259, %v260
        %v262 = vrot.slane %v261, 2
        %v263 = vadd.f32 %v261, %v262
        %v264 = vrot.slane %v263, 1
        %v265 = vadd.f32 %v263, %v264
        %v266 = vsel %vm234, %v257, 0.0
        %v267 = vrot.slane %v266, 4
        %v268 = vadd.f32 %v266, %v267
        %v269 = vrot.slane %v268, 2
        %v270 = vadd.f32 %v268, %v269
        %v271 = vrot.slane %v270, 1
        %v272 = vadd.f32 %v270, %v271
        %v273 = vrcp.pop %v265
        %v274 = vrcp.pop %v272
        %v277 = vcombine.low %v273, %v274
        %v279 = vmul.f32 %v255, %v277
        %v280 = vlaneseq
        %v281 = vshrl.u32 %v280, 7
        %v282 = vsub.s32 0, %v281
        %v283 = vrot.slane %v230, %v282
        %v284 = vlaneseq
        %v285 = vshrl.u32 %v284, 7
        %v286 = vsub.s32 1, %v285
        %v287 = vrot.slane %v230, %v286
        %vm288 = vcmp.eq.s32.totalorder %v283, %v228
        %vm289 = vcmp.eq.s32.totalorder %v287, %v228
        %v291 = vcombine.high %v279, %v279
        %v293 = vsel %vm288, %v279, 0.0
        %v294 = vsel %vm289, %v291, 0.0
        %v295 = vsel %vm288, 1, 0
        %v296 = vsel %vm289, 1, 0
        %v297 = vcvt.s32.f32 %v295
        %v298 = vcvt.s32.f32 %v296
        %v299 = vadd.f32 %v293, 0.0
        %v300 = vadd.f32 %v294, 0.0
        %v301 = vadd.f32 %v279, 0.0
        %v302 = vadd.f32 %v297, 0.0
        %v303 = vadd.f32 %v298, 0.0
        %v304 = vld [vmem:[#allocation2] sm:$0xff]
        %v307 = vcombine.low %v299, %v300
        %v309 = vadd.f32 %v304, %v307
        %310 = vst [vmem:[#allocation2] sm:$0xff] %v309
        %s311 = scalar_lea.vmem [#allocation2], 8
        %v312 = vld [vmem:[%s311] sm:$0xff]
        %v313 = vadd.f32 %v312, %v301
        %314 = vst [vmem:[%s311] sm:$0xff] %v313
        %s315 = scalar_lea.vmem [#allocation2], 16
        %v316 = vld [vmem:[%s315] sm:$0xff]
        %v319 = vcombine.low %v302, %v303
        %v321 = vadd.f32 %v316, %v319
        %322 = vst [vmem:[%s315] sm:$0xff] %v321
        // Predicated region
        $region41: #{tpu_custom_call.1} parent=27 // pred_check
          %p323 = pneg %p220
        $region42: #{tpu_custom_call.1} parent=27 // pred_check_branch
          %325 = sbr.rel (%p323) target = $region44
        $region43: #{tpu_custom_call.1} parent=27 // pred_region
          %v326 = vld [vmem:[#allocation2] sm:$0xff]
          %v327 = vld [vmem:[#allocation2 + $0x8] sm:$0xff]
          %v328 = vld [vmem:[#allocation2 + $0x10] sm:$0xff]
          %v332 = vcombine.high %v326, %v326
          %v333 = vcombine.high %v327, %v327
          %v334 = vcombine.high %v328, %v328
          %v338 = vsel %vm234, %v326, 0.0
          %v339 = vsel %vm234, %v332, 0.0
          %v340 = vadd.f32 %v338, %v339
          %341 = vadd.xlane.f32.xlu0 %v340
          %v342 = vpop.xlane.xlu0 %341
          %v343 = vsel %vm234, %v327, 0.0
          %v344 = vsel %vm234, %v333, 0.0
          %v345 = vadd.f32 %v343, %v344
          %346 = vadd.xlane.f32.xlu0 %v345
          %v347 = vpop.xlane.xlu0 %346
          %v348 = vsel %vm234, %v328, 0.0
          %v349 = vsel %vm234, %v334, 0.0
          %v350 = vadd.f32 %v348, %v349
          %351 = vadd.xlane.f32.xlu0 %v350
          %v352 = vpop.xlane.xlu0 %351
          %v356 = vlaneseq
          %v357 = vand.u32 %v356, 127
          %v358 = vlaneseq
          %v359 = vshrl.u32 %v358, 7
          %v360 = vsub.s32 %v357, %v359
          %v361 = vrot.slane %v342, %v360
          %v362 = vlaneseq
          %v363 = vshrl.u32 %v362, 7
          %v364 = vsub.s32 %v357, %v363
          %v365 = vrot.slane %v347, %v364
          %v366 = vlaneseq
          %v367 = vshrl.u32 %v366, 7
          %v368 = vsub.s32 %v357, %v367
          %v369 = vrot.slane %v352, %v368
          %vm370 = vcmask 1041409
          %v371 = vsel %vm370, %v365, %v361
          %vm372 = vcmask 1042434
          %v373 = vsel %vm372, %v369, %v371
          %vm375 = vcmask 26624
          %376 = vst.msk [vmem:[%s219] sm:$0x7] %vm375, %v373
        $region44: #{tpu_custom_call.1} parent=27 // pred_fallthru
          _
        %p377 = scmp.lt.s32.totalorder %s23, 1
        %s378 = scalar_select %p377, %s23, 1
        %s379 = smul.addr %s378, 4
        %s380 = scalar_lea.vmem %s2, %s379
        // Predicated region
        $region45: #{tpu_custom_call.1} parent=27 // pred_check
          %p381 = pneg %p105
        $region46: #{tpu_custom_call.1} parent=27 // pred_check_branch
          %383 = sbr.rel (%p381) target = $region48
        $region47: #{tpu_custom_call.1} parent=27 // pred_region
          _
        $region48: #{tpu_custom_call.1} parent=27 // pred_fallthru
          _
      $region28: #{tpu_custom_call.1} parent=5 // pred_fallthru
        _
      %p384 = scmp.le.s32.totalorder 2, %s14
      // Predicated region
      $region49: #{tpu_custom_call.1} parent=5 // pred_check
        %p385 = pneg %p384
      $region50: #{tpu_custom_call.1} parent=5 // pred_check_branch
        %387 = sbr.rel (%p385) target = $region52
      $region51: #{tpu_custom_call.1} parent=5 // pred_region
        %s388 = ssub.s32 %s14, 2
        // Predicated region
        $region53: #{tpu_custom_call.1} parent=51 // pred_check
          %p389 = pneg %p111
        $region54: #{tpu_custom_call.1} parent=51 // pred_check_branch
          %391 = sbr.rel (%p389) target = $region56
        $region55: #{tpu_custom_call.1} parent=51 // pred_region
          %p392 = scmp.lt.s32.totalorder %s25, 1
          %s393 = scalar_select %p392, %s25, 1
          %s394 = smul.addr %s393, 4
          %s395 = scalar_lea.vmem %s2, %s394
        $region56: #{tpu_custom_call.1} parent=51 // pred_fallthru
          _
      $region52: #{tpu_custom_call.1} parent=5 // pred_fallthru
        _
    $region6: #{tpu_custom_call.1} parent=1 // loop_footer
      %s18 = sadd.s32 1, %s14
    $region7: #{tpu_custom_call.1} parent=1 // loop_footer_branch
      %13 = sbr.rel target = $region3
    $region8: #{tpu_custom_call.1} parent=1 // loop_exit
      _
    %396 = vsyncpa [#allocation4], 1
    %s397 = scalar_lea.sflag [#allocation4], 1
    %398 = vsyncpa %s397, 1
    %399 = vsyncpa [#allocation6], 1
    %s400 = scalar_lea.sflag [#allocation6], 1
    %401 = vsyncpa %s400, 1

</llo_original>
